<compile_context>
chip_gen: v5e
topology: v5e:2x2
jax: 0.10.0
libtpu: 0.0.40
codegen_flags: <defaults>
</compile_context>

<pallas_src>
import functools

import numpy as np
import jax
import jax.numpy as jnp
from jax import lax
from jax.experimental import pallas as pl
from jax.experimental.pallas import tpu as pltpu


# ----------------------------------------------------------------------------
# Fused ResBlock kernel (BB batch images per grid step)
# ----------------------------------------------------------------------------
def _resblock_kernel(xp_ref, w1_ref, b1_ref, w2_ref, b2_ref, o_ref,
                     *, BB, H, W, C_in, C_out):
    M = BB * H * W

    # Load the zero-padded tile once; ReLU once (ReLU(0)=0 so padding commutes).
    xt = xp_ref[...]                                      # (BB, Hp, Wp, C_in) f32
    res = xt[:, 1:1 + H, 1:1 + W, :].reshape(M, C_in)     # residual (pre-ReLU centre)
    xr = jnp.maximum(xt, 0.0)                             # ReLU(x), padded

    # In-kernel im2col: 9 shifted taps concatenated along lanes.
    cols = []
    for i in range(3):
        for j in range(3):
            cols.append(xr[:, i:i + H, j:j + W, :].reshape(M, C_in))
    patches = jnp.concatenate(cols, axis=-1).astype(jnp.bfloat16)   # (M, 9*C_in)

    # 3x3 conv (C_in -> C_out): bf16 MXU pass, f32 accumulation; bias/ReLU in f32.
    t = jnp.dot(patches, w1_ref[...], preferred_element_type=jnp.float32)
    t = jnp.maximum(t + b1_ref[...], 0.0)                 # (M, C_out) — VMEM only

    # 1x1 conv (C_out -> C_in) + bias + residual, written lane-dense (C_in lanes).
    y = jnp.dot(t.astype(jnp.bfloat16), w2_ref[...],
                preferred_element_type=jnp.float32)       # (M, C_in)
    o_ref[...] = (res + y + b2_ref[...]).reshape(BB, H * W, C_in)


def _pick_batch_block(B, HW, target_rows=512):
    """Largest divisor of B whose row count BB*HW stays <= target_rows."""
    bb = 1
    for cand in range(1, B + 1):
        if B % cand == 0 and cand * HW <= target_rows:
            bb = cand
    return bb


def resblock_forward(params, x):
    """ResBlock forward. x: (B, C_in, H, W) NCHW float32 -> (B, C_in, H, W)."""
    B, C_in, H, W = x.shape
    C_out = params["w1"].shape[0]
    Hp, Wp = H + 2, W + 2
    BB = _pick_batch_block(B, H * W)

    # Layout plumbing outside the kernel (cheap XLA ops): NCHW -> NHWC + zero pad.
    x_nhwc = jnp.transpose(x, (0, 2, 3, 1)).astype(jnp.float32)
    xp = jnp.pad(x_nhwc, ((0, 0), (1, 1), (1, 1), (0, 0)))

    # Pack weights once: (kh, kw, cin) column order matches the in-kernel im2col.
    w1_mat = jnp.transpose(params["w1"], (2, 3, 1, 0)).reshape(9 * C_in, C_out)
    w1_mat = w1_mat.astype(jnp.bfloat16)                                  # (9*C_in, C_out)
    w2_mat = jnp.transpose(params["w2"].reshape(C_in, C_out)).astype(jnp.bfloat16)  # (C_out, C_in)
    b1 = params["b1"].reshape(1, C_out).astype(jnp.float32)
    b2 = params["b2"].reshape(1, C_in).astype(jnp.float32)

    kernel = functools.partial(_resblock_kernel, BB=BB, H=H, W=W,
                               C_in=C_in, C_out=C_out)
    out = pl.pallas_call(
        kernel,
        out_shape=jax.ShapeDtypeStruct((B, H * W, C_in), jnp.float32),
        grid=(B // BB,),
        in_specs=[
            pl.BlockSpec((BB, Hp, Wp, C_in), lambda g: (g, 0, 0, 0)),   # padded image block
            pl.BlockSpec((9 * C_in, C_out), lambda g: (0, 0)),          # w1 (resident)
            pl.BlockSpec((1, C_out), lambda g: (0, 0)),                 # b1 (resident)
            pl.BlockSpec((C_out, C_in), lambda g: (0, 0)),              # w2 (resident)
            pl.BlockSpec((1, C_in), lambda g: (0, 0)),                  # b2 (resident)
        ],
        out_specs=pl.BlockSpec((BB, H * W, C_in), lambda g: (g, 0, 0)),
        compiler_params=pltpu.CompilerParams(
            dimension_semantics=("parallel",)),                          # v7x: 2 TCs
    )(xp, w1_mat, b1, w2_mat, b2)

    # (B, H*W, C_in) NHWC-flat -> (B, C_in, H, W) NCHW (matches torch layout).
    return jnp.transpose(out.reshape(B, H, W, C_in), (0, 3, 1, 2))


# ----------------------------------------------------------------------------
# Pure-JAX f32 reference (silent correctness check)
# ----------------------------------------------------------------------------
def resblock_reference(params, x):
    relu = lambda v: jnp.maximum(v, 0.0)
    x_nhwc = jnp.transpose(x, (0, 2, 3, 1)).astype(jnp.float32)
    w1_hwio = jnp.transpose(params["w1"], (2, 3, 1, 0))
    w2_hwio = jnp.transpose(params["w2"], (2, 3, 1, 0))
    t = lax.conv_general_dilated(
        relu(x_nhwc), w1_hwio, (1, 1), [(1, 1), (1, 1)],
        dimension_numbers=("NHWC", "HWIO", "NHWC"),
        precision=lax.Precision.HIGHEST) + params["b1"].reshape(1, 1, 1, -1)
    y = lax.conv_general_dilated(
        relu(t), w2_hwio, (1, 1), [(0, 0), (0, 0)],
        dimension_numbers=("NHWC", "HWIO", "NHWC"),
        precision=lax.Precision.HIGHEST) + params["b2"].reshape(1, 1, 1, -1)
    return jnp.transpose(x_nhwc + y, (0, 3, 1, 2))


# ----------------------------------------------------------------------------
# Deterministic synthetic parameters (shapes from ResBlock.__init__)
# ----------------------------------------------------------------------------
def init_params(key, c_in, c_out):
    k1, k2, k3, k4 = jax.random.split(key, 4)
    w1 = jax.random.normal(k1, (c_out, c_in, 3, 3), jnp.float32) / np.sqrt(c_in * 9)
    b1 = jax.random.normal(k2, (c_out,), jnp.float32) * 0.01
    w2 = jax.random.normal(k3, (c_in, c_out, 1, 1), jnp.float32) / np.sqrt(c_out)
    b2 = jax.random.normal(k4, (c_in,), jnp.float32) * 0.01
    return {"w1": w1, "b1": b1, "w2": w2, "b2": b2}


if __name__ == "__main__":
    # ResBlock(128, 32) as used in the encoder trunk; small spatial/batch.
    B, C_in, C_out, H, W = 2, 128, 32, 8, 8

    key = jax.random.PRNGKey(0)
    k_params, k_x = jax.random.split(key)
    params = init_params(k_params, C_in, C_out)
    x = jax.random.normal(k_x, (B, C_in, H, W), jnp.float32)

    forward = jax.jit(resblock_forward)
    out = jax.block_until_ready(forward(params, x))
    assert out.shape == (B, C_in, H, W), out.shape

    ref = jax.block_until_ready(resblock_reference(params, x))
    # bf16 MXU operands with f32 accumulation -> slightly looser tolerance than
    # an f32 HIGHEST-precision reference.
    if not np.allclose(np.asarray(out), np.asarray(ref), atol=2e-2, rtol=2e-2):
        max_err = float(np.max(np.abs(np.asarray(out) - np.asarray(ref))))
        raise AssertionError(f"Pallas output does not match JAX reference (max abs err {max_err})")

    print("KERNEL_OK")
</pallas_src>

<mosaic_0001>
module attributes {stable_mosaic.version = 11 : i64} {
  func.func @_resblock_kernel(%arg0: i32, %arg1: memref<2x10x10x128xf32, #tpu.memory_space<vmem>>, %arg2: memref<1152x32xbf16, #tpu.memory_space<vmem>>, %arg3: memref<1x32xf32, #tpu.memory_space<vmem>>, %arg4: memref<32x128xbf16, #tpu.memory_space<vmem>>, %arg5: memref<1x128xf32, #tpu.memory_space<vmem>>, %arg6: memref<2x64x128xf32, #tpu.memory_space<vmem>>) attributes {dimension_semantics = [#tpu.dimension_semantics<parallel>], iteration_bounds = array<i64: 1>, scalar_prefetch = 0 : i64, scratch_operands = 0 : i64, tpu.core_type = #tpu.core_type<tc>, window_params = [{transform_indices = @transform_0, window_bounds = array<i64: 2, 10, 10, 128>}, {pipeline_mode = #tpu.pipeline_mode<synchronous>, transform_indices = @transform_1, window_bounds = array<i64: 1152, 32>}, {pipeline_mode = #tpu.pipeline_mode<synchronous>, transform_indices = @transform_2, window_bounds = array<i64: 1, 32>}, {pipeline_mode = #tpu.pipeline_mode<synchronous>, transform_indices = @transform_3, window_bounds = array<i64: 32, 128>}, {pipeline_mode = #tpu.pipeline_mode<synchronous>, transform_indices = @transform_4, window_bounds = array<i64: 1, 128>}, {transform_indices = @transform_5, window_bounds = array<i64: 2, 64, 128>}]} {
    %c0 = arith.constant 0 : index
    %c0_0 = arith.constant 0 : index
    %c0_1 = arith.constant 0 : index
    %c0_2 = arith.constant 0 : index
    %0 = vector.load %arg1[%c0, %c0_0, %c0_1, %c0_2] : memref<2x10x10x128xf32, #tpu.memory_space<vmem>>, vector<2x10x10x128xf32>
    %1 = vector.extract_strided_slice %0 {offsets = [0, 1, 1, 0], sizes = [2, 8, 8, 128], strides = [1, 1, 1, 1]} : vector<2x10x10x128xf32> to vector<2x8x8x128xf32>
    %2 = vector.shape_cast %1 : vector<2x8x8x128xf32> to vector<128x128xf32>
    %cst = arith.constant 0.000000e+00 : f32
    %3 = vector.broadcast %cst : f32 to vector<2x10x10x128xf32>
    %4 = arith.maximumf %0, %3 : vector<2x10x10x128xf32>
    %5 = vector.extract_strided_slice %4 {offsets = [0, 0, 0, 0], sizes = [2, 8, 8, 128], strides = [1, 1, 1, 1]} : vector<2x10x10x128xf32> to vector<2x8x8x128xf32>
    %6 = vector.shape_cast %5 : vector<2x8x8x128xf32> to vector<128x128xf32>
    %7 = vector.extract_strided_slice %4 {offsets = [0, 0, 1, 0], sizes = [2, 8, 8, 128], strides = [1, 1, 1, 1]} : vector<2x10x10x128xf32> to vector<2x8x8x128xf32>
    %8 = vector.shape_cast %7 : vector<2x8x8x128xf32> to vector<128x128xf32>
    %9 = vector.extract_strided_slice %4 {offsets = [0, 0, 2, 0], sizes = [2, 8, 8, 128], strides = [1, 1, 1, 1]} : vector<2x10x10x128xf32> to vector<2x8x8x128xf32>
    %10 = vector.shape_cast %9 : vector<2x8x8x128xf32> to vector<128x128xf32>
    %11 = vector.extract_strided_slice %4 {offsets = [0, 1, 0, 0], sizes = [2, 8, 8, 128], strides = [1, 1, 1, 1]} : vector<2x10x10x128xf32> to vector<2x8x8x128xf32>
    %12 = vector.shape_cast %11 : vector<2x8x8x128xf32> to vector<128x128xf32>
    %13 = vector.extract_strided_slice %4 {offsets = [0, 1, 1, 0], sizes = [2, 8, 8, 128], strides = [1, 1, 1, 1]} : vector<2x10x10x128xf32> to vector<2x8x8x128xf32>
    %14 = vector.shape_cast %13 : vector<2x8x8x128xf32> to vector<128x128xf32>
    %15 = vector.extract_strided_slice %4 {offsets = [0, 1, 2, 0], sizes = [2, 8, 8, 128], strides = [1, 1, 1, 1]} : vector<2x10x10x128xf32> to vector<2x8x8x128xf32>
    %16 = vector.shape_cast %15 : vector<2x8x8x128xf32> to vector<128x128xf32>
    %17 = vector.extract_strided_slice %4 {offsets = [0, 2, 0, 0], sizes = [2, 8, 8, 128], strides = [1, 1, 1, 1]} : vector<2x10x10x128xf32> to vector<2x8x8x128xf32>
    %18 = vector.shape_cast %17 : vector<2x8x8x128xf32> to vector<128x128xf32>
    %19 = vector.extract_strided_slice %4 {offsets = [0, 2, 1, 0], sizes = [2, 8, 8, 128], strides = [1, 1, 1, 1]} : vector<2x10x10x128xf32> to vector<2x8x8x128xf32>
    %20 = vector.shape_cast %19 : vector<2x8x8x128xf32> to vector<128x128xf32>
    %21 = vector.extract_strided_slice %4 {offsets = [0, 2, 2, 0], sizes = [2, 8, 8, 128], strides = [1, 1, 1, 1]} : vector<2x10x10x128xf32> to vector<2x8x8x128xf32>
    %22 = vector.shape_cast %21 : vector<2x8x8x128xf32> to vector<128x128xf32>
    %23 = tpu.concatenate %6, %8, %10, %12, %14, %16, %18, %20, %22 in 1 : vector<128x128xf32>, vector<128x128xf32>, vector<128x128xf32>, vector<128x128xf32>, vector<128x128xf32>, vector<128x128xf32>, vector<128x128xf32>, vector<128x128xf32>, vector<128x128xf32> -> vector<128x1152xf32>
    %24 = arith.truncf %23 : vector<128x1152xf32> to vector<128x1152xbf16>
    %c0_3 = arith.constant 0 : index
    %c0_4 = arith.constant 0 : index
    %25 = vector.load %arg2[%c0_3, %c0_4] : memref<1152x32xbf16, #tpu.memory_space<vmem>>, vector<1152x32xbf16>
    %cst_5 = arith.constant dense<0.000000e+00> : vector<128x32xf32>
    %26 = tpu.matmul %24, %25, %cst_5 {dimension_numbers = #tpu.dot_dimension_numbers<[1], [0], [0], [1], [0, 0, 1, 1], [], []>} : vector<128x1152xbf16>, vector<1152x32xbf16>, vector<128x32xf32> -> vector<128x32xf32>
    %c0_6 = arith.constant 0 : index
    %c0_7 = arith.constant 0 : index
    %27 = vector.load %arg3[%c0_6, %c0_7] : memref<1x32xf32, #tpu.memory_space<vmem>>, vector<1x32xf32>
    %28 = vector.broadcast %27 : vector<1x32xf32> to vector<128x32xf32>
    %29 = arith.addf %26, %28 : vector<128x32xf32>
    %cst_8 = arith.constant 0.000000e+00 : f32
    %30 = vector.broadcast %cst_8 : f32 to vector<128x32xf32>
    %31 = arith.maximumf %29, %30 : vector<128x32xf32>
    %32 = arith.truncf %31 : vector<128x32xf32> to vector<128x32xbf16>
    %c0_9 = arith.constant 0 : index
    %c0_10 = arith.constant 0 : index
    %33 = vector.load %arg4[%c0_9, %c0_10] : memref<32x128xbf16, #tpu.memory_space<vmem>>, vector<32x128xbf16>
    %cst_11 = arith.constant dense<0.000000e+00> : vector<128x128xf32>
    %34 = tpu.matmul %32, %33, %cst_11 {dimension_numbers = #tpu.dot_dimension_numbers<[1], [0], [0], [1], [0, 0, 1, 1], [], []>} : vector<128x32xbf16>, vector<32x128xbf16>, vector<128x128xf32> -> vector<128x128xf32>
    %35 = arith.addf %2, %34 : vector<128x128xf32>
    %c0_12 = arith.constant 0 : index
    %c0_13 = arith.constant 0 : index
    %36 = vector.load %arg5[%c0_12, %c0_13] : memref<1x128xf32, #tpu.memory_space<vmem>>, vector<1x128xf32>
    %37 = vector.broadcast %36 : vector<1x128xf32> to vector<128x128xf32>
    %38 = arith.addf %35, %37 : vector<128x128xf32>
    %39 = vector.shape_cast %38 : vector<128x128xf32> to vector<2x64x128xf32>
    %c0_14 = arith.constant 0 : index
    %c0_15 = arith.constant 0 : index
    %c0_16 = arith.constant 0 : index
    %40 = vector.load %arg6[%c0_14, %c0_15, %c0_16] : memref<2x64x128xf32, #tpu.memory_space<vmem>>, vector<2x64x128xf32>
    tpu.vector_store %arg6[%c0_14, %c0_15, %c0_16], %39 {strides = array<i32>} : memref<2x64x128xf32, #tpu.memory_space<vmem>>, vector<2x64x128xf32>,
    return
  }
  func.func @transform_0(%arg0: i32) -> (i32, i32, i32, i32) {
    %c0_i32 = arith.constant 0 : i32
    %c0_i32_0 = arith.constant 0 : i32
    %c0_i32_1 = arith.constant 0 : i32
    %c0_i32_2 = arith.constant 0 : i32
    return %arg0, %c0_i32, %c0_i32_0, %c0_i32_1 : i32, i32, i32, i32
  }
  func.func @transform_1(%arg0: i32) -> (i32, i32) {
    %c0_i32 = arith.constant 0 : i32
    %c0_i32_0 = arith.constant 0 : i32
    %c0_i32_1 = arith.constant 0 : i32
    return %c0_i32, %c0_i32_0 : i32, i32
  }
  func.func @transform_2(%arg0: i32) -> (i32, i32) {
    %c0_i32 = arith.constant 0 : i32
    %c0_i32_0 = arith.constant 0 : i32
    %c0_i32_1 = arith.constant 0 : i32
    return %c0_i32, %c0_i32_0 : i32, i32
  }
  func.func @transform_3(%arg0: i32) -> (i32, i32) {
    %c0_i32 = arith.constant 0 : i32
    %c0_i32_0 = arith.constant 0 : i32
    %c0_i32_1 = arith.constant 0 : i32
    return %c0_i32, %c0_i32_0 : i32, i32
  }
  func.func @transform_4(%arg0: i32) -> (i32, i32) {
    %c0_i32 = arith.constant 0 : i32
    %c0_i32_0 = arith.constant 0 : i32
    %c0_i32_1 = arith.constant 0 : i32
    return %c0_i32, %c0_i32_0 : i32, i32
  }
  func.func @transform_5(%arg0: i32) -> (i32, i32, i32) {
    %c0_i32 = arith.constant 0 : i32
    %c0_i32_0 = arith.constant 0 : i32
    %c0_i32_1 = arith.constant 0 : i32
    return %arg0, %c0_i32, %c0_i32_0 : i32, i32, i32
  }
}

</mosaic_0001>

<llo_original>
// kernel: resblock_forward.1
$region0: #{resblock_forward.1}
  #allocation0 [shape = 'u32[]', space=smem, size = 0x4, offset = 0x4, fixed_abs, tag = 'smem constant byte address 0x4 - core index']
  #allocation1 [shape = 'u32[72,128]{1,0:T(1,128)}', space=vmem, size = 0x9000, scoped, tag = 'internal scratch']
  %s0 = inlined_call_operand.vmem [shape: f32[2,10,10,128], index: 0, kind: input, shape index: {}]
  %s1 = inlined_call_operand.vmem [shape: bf16[1152,32], index: 1, kind: input, shape index: {}]
  %s2 = inlined_call_operand.vmem [shape: f32[1,32], index: 2, kind: input, shape index: {}]
  %s3 = inlined_call_operand.vmem [shape: bf16[32,128], index: 3, kind: input, shape index: {}]
  %s4 = inlined_call_operand.vmem [shape: f32[1,128], index: 4, kind: input, shape index: {}]
  %s5 = inlined_call_operand.hbm [shape: f32[2,64,128], index: 5, kind: output, shape index: {}]
  %s6 = sld [smem:[#allocation0]]
  $region30: #{resblock_forward.1} parent=0
    _
  %s8 = ssub.s32 1, %s6
  %s9 = scalar_select 0, %s8, %s6
  $region1: #{resblock_forward.1} parent=0
    #allocation2 [shape = 'u8[65536]{0}', space=vmem, size = 0x10000, scoped, tag = 'output window, operand 0, single buffered']
    #allocation3 [shape = 's32[1]{0}', space=sflag, size = 0x4, scoped, tag = 'scoped memory for resblock_forward.1']
    %10 = vsyncpa [#allocation3], 0
    // Predicated region
    $region2: #{resblock_forward.1} parent=1 // pred_check
      _
    $region3: #{resblock_forward.1} parent=1 // pred_check_branch
      %12 = sbr.rel (0) target = $region5
    $region4: #{resblock_forward.1} parent=1 // pred_region
      _
    $region5: #{resblock_forward.1} parent=1 // pred_fallthru
      _
    // Predicated region
    $region6: #{resblock_forward.1} parent=1 // pred_check
      _
    $region7: #{resblock_forward.1} parent=1 // pred_check_branch
      %14 = sbr.rel (0) target = $region9
    $region8: #{resblock_forward.1} parent=1 // pred_region
      _
    $region9: #{resblock_forward.1} parent=1 // pred_fallthru
      _
    // Predicated region
    $region10: #{resblock_forward.1} parent=1 // pred_check
      _
    $region11: #{resblock_forward.1} parent=1 // pred_check_branch
      %16 = sbr.rel (0) target = $region13
    $region12: #{resblock_forward.1} parent=1 // pred_region
      _
    $region13: #{resblock_forward.1} parent=1 // pred_fallthru
      _
    // Predicated region
    $region14: #{resblock_forward.1} parent=1 // pred_check
      _
    $region15: #{resblock_forward.1} parent=1 // pred_check_branch
      %18 = sbr.rel (0) target = $region17
    $region16: #{resblock_forward.1} parent=1 // pred_region
      _
    $region17: #{resblock_forward.1} parent=1 // pred_fallthru
      _
    // Predicated region
    $region18: #{resblock_forward.1} parent=1 // pred_check
      _
    $region19: #{resblock_forward.1} parent=1 // pred_check_branch
      %20 = sbr.rel (0) target = $region21
    $region20: #{resblock_forward.1} parent=1 // pred_region
      _
    $region21: #{resblock_forward.1} parent=1 // pred_fallthru
      _
    %v22 = vld [vmem:[%s0] sm:$0xff]
    %v23 = vld [vmem:[%s0 + $0x8] sm:$0x3]
    %v24 = vld [vmem:[%s0 + $0x10] sm:$0xff]
    %v25 = vld [vmem:[%s0 + $0x18] sm:$0x3]
    %v26 = vld [vmem:[%s0 + $0x20] sm:$0xff]
    %v27 = vld [vmem:[%s0 + $0x28] sm:$0x3]
    %v28 = vld [vmem:[%s0 + $0x30] sm:$0xff]
    %v29 = vld [vmem:[%s0 + $0x38] sm:$0x3]
    %v30 = vld [vmem:[%s0 + $0x40] sm:$0xff]
    %v31 = vld [vmem:[%s0 + $0x48] sm:$0x3]
    %v32 = vld [vmem:[%s0 + $0x50] sm:$0xff]
    %v33 = vld [vmem:[%s0 + $0x58] sm:$0x3]
    %v34 = vld [vmem:[%s0 + $0x60] sm:$0xff]
    %v35 = vld [vmem:[%s0 + $0x68] sm:$0x3]
    %v36 = vld [vmem:[%s0 + $0x70] sm:$0xff]
    %v37 = vld [vmem:[%s0 + $0x78] sm:$0x3]
    %v38 = vld [vmem:[%s0 + $0x80] sm:$0xff]
    %v39 = vld [vmem:[%s0 + $0x88] sm:$0x3]
    %v40 = vld [vmem:[%s0 + $0x90] sm:$0xff]
    %v41 = vld [vmem:[%s0 + $0x98] sm:$0x3]
    %v42 = vld [vmem:[%s0 + $0xa0] sm:$0xff]
    %v43 = vld [vmem:[%s0 + $0xa8] sm:$0x3]
    %v44 = vld [vmem:[%s0 + $0xb0] sm:$0xff]
    %v45 = vld [vmem:[%s0 + $0xb8] sm:$0x3]
    %v46 = vld [vmem:[%s0 + $0xc0] sm:$0xff]
    %v47 = vld [vmem:[%s0 + $0xc8] sm:$0x3]
    %v48 = vld [vmem:[%s0 + $0xd0] sm:$0xff]
    %v49 = vld [vmem:[%s0 + $0xd8] sm:$0x3]
    %v50 = vld [vmem:[%s0 + $0xe0] sm:$0xff]
    %v51 = vld [vmem:[%s0 + $0xe8] sm:$0x3]
    %v52 = vld [vmem:[%s0 + $0xf0] sm:$0xff]
    %v53 = vld [vmem:[%s0 + $0xf8] sm:$0x3]
    %v54 = vld [vmem:[%s0 + $0x100] sm:$0xff]
    %v55 = vld [vmem:[%s0 + $0x108] sm:$0x3]
    %v56 = vld [vmem:[%s0 + $0x110] sm:$0xff]
    %v57 = vld [vmem:[%s0 + $0x118] sm:$0x3]
    %v58 = vld [vmem:[%s0 + $0x120] sm:$0xff]
    %v59 = vld [vmem:[%s0 + $0x128] sm:$0x3]
    %v60 = vld [vmem:[%s0 + $0x130] sm:$0xff]
    %v61 = vld [vmem:[%s0 + $0x138] sm:$0x3]
    %vm94 = vcmask 1046528
    %v95 = vrot.slane %v24, 1
    %v96 = vrot.slane %v25, 1
    %v97 = vsel %vm94, %v95, %v96
    %v98 = vrot.slane %v26, 1
    %v99 = vrot.slane %v27, 1
    %v100 = vsel %vm94, %v98, %v99
    %v101 = vrot.slane %v28, 1
    %v102 = vrot.slane %v29, 1
    %v103 = vsel %vm94, %v101, %v102
    %v104 = vrot.slane %v30, 1
    %v105 = vrot.slane %v31, 1
    %v106 = vsel %vm94, %v104, %v105
    %v107 = vrot.slane %v32, 1
    %v108 = vrot.slane %v33, 1
    %v109 = vsel %vm94, %v107, %v108
    %v110 = vrot.slane %v34, 1
    %v111 = vrot.slane %v35, 1
    %v112 = vsel %vm94, %v110, %v111
    %v113 = vrot.slane %v36, 1
    %v114 = vrot.slane %v37, 1
    %v115 = vsel %vm94, %v113, %v114
    %v116 = vrot.slane %v38, 1
    %v117 = vrot.slane %v39, 1
    %v118 = vsel %vm94, %v116, %v117
    %v119 = vrot.slane %v44, 1
    %v120 = vrot.slane %v45, 1
    %v121 = vsel %vm94, %v119, %v120
    %v122 = vrot.slane %v46, 1
    %v123 = vrot.slane %v47, 1
    %v124 = vsel %vm94, %v122, %v123
    %v125 = vrot.slane %v48, 1
    %v126 = vrot.slane %v49, 1
    %v127 = vsel %vm94, %v125, %v126
    %v128 = vrot.slane %v50, 1
    %v129 = vrot.slane %v51, 1
    %v130 = vsel %vm94, %v128, %v129
    %v131 = vrot.slane %v52, 1
    %v132 = vrot.slane %v53, 1
    %v133 = vsel %vm94, %v131, %v132
    %v134 = vrot.slane %v54, 1
    %v135 = vrot.slane %v55, 1
    %v136 = vsel %vm94, %v134, %v135
    %v137 = vrot.slane %v56, 1
    %v138 = vrot.slane %v57, 1
    %v139 = vsel %vm94, %v137, %v138
    %v140 = vrot.slane %v58, 1
    %v141 = vrot.slane %v59, 1
    %v142 = vsel %vm94, %v140, %v141
    %v159 = vmax.f32 %v22, 0.0
    %v160 = vmax.f32 %v23, 0.0
    %v161 = vmax.f32 %v24, 0.0
    %v162 = vmax.f32 %v25, 0.0
    %v163 = vmax.f32 %v26, 0.0
    %v164 = vmax.f32 %v27, 0.0
    %v165 = vmax.f32 %v28, 0.0
    %v166 = vmax.f32 %v29, 0.0
    %v167 = vmax.f32 %v30, 0.0
    %v168 = vmax.f32 %v31, 0.0
    %v169 = vmax.f32 %v32, 0.0
    %v170 = vmax.f32 %v33, 0.0
    %v171 = vmax.f32 %v34, 0.0
    %v172 = vmax.f32 %v35, 0.0
    %v173 = vmax.f32 %v36, 0.0
    %v174 = vmax.f32 %v37, 0.0
    %v175 = vmax.f32 %v38, 0.0
    %v176 = vmax.f32 %v39, 0.0
    %v177 = vmax.f32 %v40, 0.0
    %v178 = vmax.f32 %v41, 0.0
    %v179 = vmax.f32 %v42, 0.0
    %v180 = vmax.f32 %v43, 0.0
    %v181 = vmax.f32 %v44, 0.0
    %v182 = vmax.f32 %v45, 0.0
    %v183 = vmax.f32 %v46, 0.0
    %v184 = vmax.f32 %v47, 0.0
    %v185 = vmax.f32 %v48, 0.0
    %v186 = vmax.f32 %v49, 0.0
    %v187 = vmax.f32 %v50, 0.0
    %v188 = vmax.f32 %v51, 0.0
    %v189 = vmax.f32 %v52, 0.0
    %v190 = vmax.f32 %v53, 0.0
    %v191 = vmax.f32 %v54, 0.0
    %v192 = vmax.f32 %v55, 0.0
    %v193 = vmax.f32 %v56, 0.0
    %v194 = vmax.f32 %v57, 0.0
    %v195 = vmax.f32 %v58, 0.0
    %v196 = vmax.f32 %v59, 0.0
    %v197 = vmax.f32 %v60, 0.0
    %v198 = vmax.f32 %v61, 0.0
    %v231 = vrot.slane %v159, 1
    %v232 = vrot.slane %v160, 1
    %v233 = vsel %vm94, %v231, %v232
    %v234 = vrot.slane %v161, 1
    %v235 = vrot.slane %v162, 1
    %v236 = vsel %vm94, %v234, %v235
    %v237 = vrot.slane %v163, 1
    %v238 = vrot.slane %v164, 1
    %v239 = vsel %vm94, %v237, %v238
    %v240 = vrot.slane %v165, 1
    %v241 = vrot.slane %v166, 1
    %v242 = vsel %vm94, %v240, %v241
    %v243 = vrot.slane %v167, 1
    %v244 = vrot.slane %v168, 1
    %v245 = vsel %vm94, %v243, %v244
    %v246 = vrot.slane %v169, 1
    %v247 = vrot.slane %v170, 1
    %v248 = vsel %vm94, %v246, %v247
    %v249 = vrot.slane %v171, 1
    %v250 = vrot.slane %v172, 1
    %v251 = vsel %vm94, %v249, %v250
    %v252 = vrot.slane %v173, 1
    %v253 = vrot.slane %v174, 1
    %v254 = vsel %vm94, %v252, %v253
    %v255 = vrot.slane %v179, 1
    %v256 = vrot.slane %v180, 1
    %v257 = vsel %vm94, %v255, %v256
    %v258 = vrot.slane %v181, 1
    %v259 = vrot.slane %v182, 1
    %v260 = vsel %vm94, %v258, %v259
    %v261 = vrot.slane %v183, 1
    %v262 = vrot.slane %v184, 1
    %v263 = vsel %vm94, %v261, %v262
    %v264 = vrot.slane %v185, 1
    %v265 = vrot.slane %v186, 1
    %v266 = vsel %vm94, %v264, %v265
    %v267 = vrot.slane %v187, 1
    %v268 = vrot.slane %v188, 1
    %v269 = vsel %vm94, %v267, %v268
    %v270 = vrot.slane %v189, 1
    %v271 = vrot.slane %v190, 1
    %v272 = vsel %vm94, %v270, %v271
    %v273 = vrot.slane %v191, 1
    %v274 = vrot.slane %v192, 1
    %v275 = vsel %vm94, %v273, %v274
    %v276 = vrot.slane %v193, 1
    %v277 = vrot.slane %v194, 1
    %v278 = vsel %vm94, %v276, %v277
    %vm295 = vcmask 1045504
    %v296 = vrot.slane %v159, 2
    %v297 = vrot.slane %v160, 2
    %v298 = vsel %vm295, %v296, %v297
    %v299 = vrot.slane %v161, 2
    %v300 = vrot.slane %v162, 2
    %v301 = vsel %vm295, %v299, %v300
    %v302 = vrot.slane %v163, 2
    %v303 = vrot.slane %v164, 2
    %v304 = vsel %vm295, %v302, %v303
    %v305 = vrot.slane %v165, 2
    %v306 = vrot.slane %v166, 2
    %v307 = vsel %vm295, %v305, %v306
    %v308 = vrot.slane %v167, 2
    %v309 = vrot.slane %v168, 2
    %v310 = vsel %vm295, %v308, %v309
    %v311 = vrot.slane %v169, 2
    %v312 = vrot.slane %v170, 2
    %v313 = vsel %vm295, %v311, %v312
    %v314 = vrot.slane %v171, 2
    %v315 = vrot.slane %v172, 2
    %v316 = vsel %vm295, %v314, %v315
    %v317 = vrot.slane %v173, 2
    %v318 = vrot.slane %v174, 2
    %v319 = vsel %vm295, %v317, %v318
    %v320 = vrot.slane %v179, 2
    %v321 = vrot.slane %v180, 2
    %v322 = vsel %vm295, %v320, %v321
    %v323 = vrot.slane %v181, 2
    %v324 = vrot.slane %v182, 2
    %v325 = vsel %vm295, %v323, %v324
    %v326 = vrot.slane %v183, 2
    %v327 = vrot.slane %v184, 2
    %v328 = vsel %vm295, %v326, %v327
    %v329 = vrot.slane %v185, 2
    %v330 = vrot.slane %v186, 2
    %v331 = vsel %vm295, %v329, %v330
    %v332 = vrot.slane %v187, 2
    %v333 = vrot.slane %v188, 2
    %v334 = vsel %vm295, %v332, %v333
    %v335 = vrot.slane %v189, 2
    %v336 = vrot.slane %v190, 2
    %v337 = vsel %vm295, %v335, %v336
    %v338 = vrot.slane %v191, 2
    %v339 = vrot.slane %v192, 2
    %v340 = vsel %vm295, %v338, %v339
    %v341 = vrot.slane %v193, 2
    %v342 = vrot.slane %v194, 2
    %v343 = vsel %vm295, %v341, %v342
    %v364 = vrot.slane %v175, 1
    %v365 = vrot.slane %v176, 1
    %v366 = vsel %vm94, %v364, %v365
    %v367 = vrot.slane %v195, 1
    %v368 = vrot.slane %v196, 1
    %v369 = vsel %vm94, %v367, %v368
    %v372 = vrot.slane %v175, 2
    %v373 = vrot.slane %v176, 2
    %v374 = vsel %vm295, %v372, %v373
    %v375 = vrot.slane %v195, 2
    %v376 = vrot.slane %v196, 2
    %v377 = vsel %vm295, %v375, %v376
    %v384 = vrot.slane %v177, 1
    %v385 = vrot.slane %v178, 1
    %v386 = vsel %vm94, %v384, %v385
    %v387 = vrot.slane %v197, 1
    %v388 = vrot.slane %v198, 1
    %v389 = vsel %vm94, %v387, %v388
    %v392 = vrot.slane %v177, 2
    %v393 = vrot.slane %v178, 2
    %v394 = vsel %vm295, %v392, %v393
    %v395 = vrot.slane %v197, 2
    %v396 = vrot.slane %v198, 2
    %v397 = vsel %vm295, %v395, %v396
    %v400 = vpack.c.bf16 %v161, %v159
    %v401 = vpack.c.bf16 %v236, %v233
    %v402 = vpack.c.bf16 %v301, %v298
    %v403 = vpack.c.bf16 %v163, %v161
    %v404 = vpack.c.bf16 %v239, %v236
    %v405 = vpack.c.bf16 %v304, %v301
    %v406 = vpack.c.bf16 %v165, %v163
    %v407 = vpack.c.bf16 %v242, %v239
    %v408 = vpack.c.bf16 %v307, %v304
    %v409 = vpack.c.bf16 %v167, %v165
    %v410 = vpack.c.bf16 %v245, %v242
    %v411 = vpack.c.bf16 %v310, %v307
    %v412 = vpack.c.bf16 %v169, %v167
    %v413 = vpack.c.bf16 %v248, %v245
    %v414 = vpack.c.bf16 %v313, %v310
    %v415 = vpack.c.bf16 %v171, %v169
    %v416 = vpack.c.bf16 %v251, %v248
    %v417 = vpack.c.bf16 %v316, %v313
    %v418 = vpack.c.bf16 %v173, %v171
    %v419 = vpack.c.bf16 %v254, %v251
    %v420 = vpack.c.bf16 %v319, %v316
    %v421 = vpack.c.bf16 %v175, %v173
    %v422 = vpack.c.bf16 %v366, %v254
    %v423 = vpack.c.bf16 %v374, %v319
    %v424 = vpack.c.bf16 %v177, %v175
    %v425 = vpack.c.bf16 %v386, %v366
    %v426 = vpack.c.bf16 %v394, %v374
    %v427 = vpack.c.bf16 %v181, %v179
    %v428 = vpack.c.bf16 %v260, %v257
    %v429 = vpack.c.bf16 %v325, %v322
    %v430 = vpack.c.bf16 %v183, %v181
    %v431 = vpack.c.bf16 %v263, %v260
    %v432 = vpack.c.bf16 %v328, %v325
    %v433 = vpack.c.bf16 %v185, %v183
    %v434 = vpack.c.bf16 %v266, %v263
    %v435 = vpack.c.bf16 %v331, %v328
    %v436 = vpack.c.bf16 %v187, %v185
    %v437 = vpack.c.bf16 %v269, %v266
    %v438 = vpack.c.bf16 %v334, %v331
    %v439 = vpack.c.bf16 %v189, %v187
    %v440 = vpack.c.bf16 %v272, %v269
    %v441 = vpack.c.bf16 %v337, %v334
    %v442 = vpack.c.bf16 %v191, %v189
    %v443 = vpack.c.bf16 %v275, %v272
    %v444 = vpack.c.bf16 %v340, %v337
    %v445 = vpack.c.bf16 %v193, %v191
    %v446 = vpack.c.bf16 %v278, %v275
    %v447 = vpack.c.bf16 %v343, %v340
    %v448 = vpack.c.bf16 %v195, %v193
    %v449 = vpack.c.bf16 %v369, %v278
    %v450 = vpack.c.bf16 %v377, %v343
    %v451 = vpack.c.bf16 %v197, %v195
    %v452 = vpack.c.bf16 %v389, %v369
    %v453 = vpack.c.bf16 %v397, %v377
    %v454 = vld [vmem:[%s1] sm:$0xf]
    %v455 = vld [vmem:[%s1 + $0x4] sm:$0xf]
    %v456 = vld [vmem:[%s1 + $0x8] sm:$0xf]
    %v457 = vld [vmem:[%s1 + $0xc] sm:$0xf]
    %v458 = vld [vmem:[%s1 + $0x10] sm:$0xf]
    %v459 = vld [vmem:[%s1 + $0x14] sm:$0xf]
    %v460 = vld [vmem:[%s1 + $0x18] sm:$0xf]
    %v461 = vld [vmem:[%s1 + $0x1c] sm:$0xf]
    %v462 = vld [vmem:[%s1 + $0x20] sm:$0xf]
    %v463 = vld [vmem:[%s1 + $0x24] sm:$0xf]
    %v464 = vld [vmem:[%s1 + $0x28] sm:$0xf]
    %v465 = vld [vmem:[%s1 + $0x2c] sm:$0xf]
    %v466 = vld [vmem:[%s1 + $0x30] sm:$0xf]
    %v467 = vld [vmem:[%s1 + $0x34] sm:$0xf]
    %v468 = vld [vmem:[%s1 + $0x38] sm:$0xf]
    %v469 = vld [vmem:[%s1 + $0x3c] sm:$0xf]
    %v470 = vld [vmem:[%s1 + $0x40] sm:$0xf]
    %v471 = vld [vmem:[%s1 + $0x44] sm:$0xf]
    %v472 = vld [vmem:[%s1 + $0x48] sm:$0xf]
    %v473 = vld [vmem:[%s1 + $0x4c] sm:$0xf]
    %v474 = vld [vmem:[%s1 + $0x50] sm:$0xf]
    %v475 = vld [vmem:[%s1 + $0x54] sm:$0xf]
    %v476 = vld [vmem:[%s1 + $0x58] sm:$0xf]
    %v477 = vld [vmem:[%s1 + $0x5c] sm:$0xf]
    %v478 = vld [vmem:[%s1 + $0x60] sm:$0xf]
    %v479 = vld [vmem:[%s1 + $0x64] sm:$0xf]
    %v480 = vld [vmem:[%s1 + $0x68] sm:$0xf]
    %v481 = vld [vmem:[%s1 + $0x6c] sm:$0xf]
    %v482 = vld [vmem:[%s1 + $0x70] sm:$0xf]
    %v483 = vld [vmem:[%s1 + $0x74] sm:$0xf]
    %v484 = vld [vmem:[%s1 + $0x78] sm:$0xf]
    %v485 = vld [vmem:[%s1 + $0x7c] sm:$0xf]
    %v486 = vld [vmem:[%s1 + $0x80] sm:$0xf]
    %v487 = vld [vmem:[%s1 + $0x84] sm:$0xf]
    %v488 = vld [vmem:[%s1 + $0x88] sm:$0xf]
    %v489 = vld [vmem:[%s1 + $0x8c] sm:$0xf]
    %v490 = vld [vmem:[%s1 + $0x90] sm:$0xf]
    %v491 = vld [vmem:[%s1 + $0x94] sm:$0xf]
    %v492 = vld [vmem:[%s1 + $0x98] sm:$0xf]
    %v493 = vld [vmem:[%s1 + $0x9c] sm:$0xf]
    %v494 = vld [vmem:[%s1 + $0xa0] sm:$0xf]
    %v495 = vld [vmem:[%s1 + $0xa4] sm:$0xf]
    %v496 = vld [vmem:[%s1 + $0xa8] sm:$0xf]
    %v497 = vld [vmem:[%s1 + $0xac] sm:$0xf]
    %v498 = vld [vmem:[%s1 + $0xb0] sm:$0xf]
    %v499 = vld [vmem:[%s1 + $0xb4] sm:$0xf]
    %v500 = vld [vmem:[%s1 + $0xb8] sm:$0xf]
    %v501 = vld [vmem:[%s1 + $0xbc] sm:$0xf]
    %v502 = vld [vmem:[%s1 + $0xc0] sm:$0xf]
    %v503 = vld [vmem:[%s1 + $0xc4] sm:$0xf]
    %v504 = vld [vmem:[%s1 + $0xc8] sm:$0xf]
    %v505 = vld [vmem:[%s1 + $0xcc] sm:$0xf]
    %v506 = vld [vmem:[%s1 + $0xd0] sm:$0xf]
    %v507 = vld [vmem:[%s1 + $0xd4] sm:$0xf]
    %v508 = vld [vmem:[%s1 + $0xd8] sm:$0xf]
    %v509 = vld [vmem:[%s1 + $0xdc] sm:$0xf]
    %v510 = vld [vmem:[%s1 + $0xe0] sm:$0xf]
    %v511 = vld [vmem:[%s1 + $0xe4] sm:$0xf]
    %v512 = vld [vmem:[%s1 + $0xe8] sm:$0xf]
    %v513 = vld [vmem:[%s1 + $0xec] sm:$0xf]
    %v514 = vld [vmem:[%s1 + $0xf0] sm:$0xf]
    %v515 = vld [vmem:[%s1 + $0xf4] sm:$0xf]
    %v516 = vld [vmem:[%s1 + $0xf8] sm:$0xf]
    %v517 = vld [vmem:[%s1 + $0xfc] sm:$0xf]
    %v518 = vld [vmem:[%s1 + $0x100] sm:$0xf]
    %v519 = vld [vmem:[%s1 + $0x104] sm:$0xf]
    %v520 = vld [vmem:[%s1 + $0x108] sm:$0xf]
    %v521 = vld [vmem:[%s1 + $0x10c] sm:$0xf]
    %v522 = vld [vmem:[%s1 + $0x110] sm:$0xf]
    %v523 = vld [vmem:[%s1 + $0x114] sm:$0xf]
    %v524 = vld [vmem:[%s1 + $0x118] sm:$0xf]
    %v525 = vld [vmem:[%s1 + $0x11c] sm:$0xf]
    %v526 = vld [vmem:[%s1 + $0x120] sm:$0xf]
    %v527 = vld [vmem:[%s1 + $0x124] sm:$0xf]
    %v528 = vld [vmem:[%s1 + $0x128] sm:$0xf]
    %v529 = vld [vmem:[%s1 + $0x12c] sm:$0xf]
    %v530 = vld [vmem:[%s1 + $0x130] sm:$0xf]
    %v531 = vld [vmem:[%s1 + $0x134] sm:$0xf]
    %v532 = vld [vmem:[%s1 + $0x138] sm:$0xf]
    %v533 = vld [vmem:[%s1 + $0x13c] sm:$0xf]
    %v534 = vld [vmem:[%s1 + $0x140] sm:$0xf]
    %v535 = vld [vmem:[%s1 + $0x144] sm:$0xf]
    %v536 = vld [vmem:[%s1 + $0x148] sm:$0xf]
    %v537 = vld [vmem:[%s1 + $0x14c] sm:$0xf]
    %v538 = vld [vmem:[%s1 + $0x150] sm:$0xf]
    %v539 = vld [vmem:[%s1 + $0x154] sm:$0xf]
    %v540 = vld [vmem:[%s1 + $0x158] sm:$0xf]
    %v541 = vld [vmem:[%s1 + $0x15c] sm:$0xf]
    %v542 = vld [vmem:[%s1 + $0x160] sm:$0xf]
    %v543 = vld [vmem:[%s1 + $0x164] sm:$0xf]
    %v544 = vld [vmem:[%s1 + $0x168] sm:$0xf]
    %v545 = vld [vmem:[%s1 + $0x16c] sm:$0xf]
    %v546 = vld [vmem:[%s1 + $0x170] sm:$0xf]
    %v547 = vld [vmem:[%s1 + $0x174] sm:$0xf]
    %v548 = vld [vmem:[%s1 + $0x178] sm:$0xf]
    %v549 = vld [vmem:[%s1 + $0x17c] sm:$0xf]
    %v550 = vld [vmem:[%s1 + $0x180] sm:$0xf]
    %v551 = vld [vmem:[%s1 + $0x184] sm:$0xf]
    %v552 = vld [vmem:[%s1 + $0x188] sm:$0xf]
    %v553 = vld [vmem:[%s1 + $0x18c] sm:$0xf]
    %v554 = vld [vmem:[%s1 + $0x190] sm:$0xf]
    %v555 = vld [vmem:[%s1 + $0x194] sm:$0xf]
    %v556 = vld [vmem:[%s1 + $0x198] sm:$0xf]
    %v557 = vld [vmem:[%s1 + $0x19c] sm:$0xf]
    %v558 = vld [vmem:[%s1 + $0x1a0] sm:$0xf]
    %v559 = vld [vmem:[%s1 + $0x1a4] sm:$0xf]
    %v560 = vld [vmem:[%s1 + $0x1a8] sm:$0xf]
    %v561 = vld [vmem:[%s1 + $0x1ac] sm:$0xf]
    %v562 = vld [vmem:[%s1 + $0x1b0] sm:$0xf]
    %v563 = vld [vmem:[%s1 + $0x1b4] sm:$0xf]
    %v564 = vld [vmem:[%s1 + $0x1b8] sm:$0xf]
    %v565 = vld [vmem:[%s1 + $0x1bc] sm:$0xf]
    %v566 = vld [vmem:[%s1 + $0x1c0] sm:$0xf]
    %v567 = vld [vmem:[%s1 + $0x1c4] sm:$0xf]
    %v568 = vld [vmem:[%s1 + $0x1c8] sm:$0xf]
    %v569 = vld [vmem:[%s1 + $0x1cc] sm:$0xf]
    %v570 = vld [vmem:[%s1 + $0x1d0] sm:$0xf]
    %v571 = vld [vmem:[%s1 + $0x1d4] sm:$0xf]
    %v572 = vld [vmem:[%s1 + $0x1d8] sm:$0xf]
    %v573 = vld [vmem:[%s1 + $0x1dc] sm:$0xf]
    %v574 = vld [vmem:[%s1 + $0x1e0] sm:$0xf]
    %v575 = vld [vmem:[%s1 + $0x1e4] sm:$0xf]
    %v576 = vld [vmem:[%s1 + $0x1e8] sm:$0xf]
    %v577 = vld [vmem:[%s1 + $0x1ec] sm:$0xf]
    %v578 = vld [vmem:[%s1 + $0x1f0] sm:$0xf]
    %v579 = vld [vmem:[%s1 + $0x1f4] sm:$0xf]
    %v580 = vld [vmem:[%s1 + $0x1f8] sm:$0xf]
    %v581 = vld [vmem:[%s1 + $0x1fc] sm:$0xf]
    %v582 = vld [vmem:[%s1 + $0x200] sm:$0xf]
    %v583 = vld [vmem:[%s1 + $0x204] sm:$0xf]
    %v584 = vld [vmem:[%s1 + $0x208] sm:$0xf]
    %v585 = vld [vmem:[%s1 + $0x20c] sm:$0xf]
    %v586 = vld [vmem:[%s1 + $0x210] sm:$0xf]
    %v587 = vld [vmem:[%s1 + $0x214] sm:$0xf]
    %v588 = vld [vmem:[%s1 + $0x218] sm:$0xf]
    %v589 = vld [vmem:[%s1 + $0x21c] sm:$0xf]
    %v590 = vld [vmem:[%s1 + $0x220] sm:$0xf]
    %v591 = vld [vmem:[%s1 + $0x224] sm:$0xf]
    %v592 = vld [vmem:[%s1 + $0x228] sm:$0xf]
    %v593 = vld [vmem:[%s1 + $0x22c] sm:$0xf]
    %v594 = vld [vmem:[%s1 + $0x230] sm:$0xf]
    %v595 = vld [vmem:[%s1 + $0x234] sm:$0xf]
    %v596 = vld [vmem:[%s1 + $0x238] sm:$0xf]
    %v597 = vld [vmem:[%s1 + $0x23c] sm:$0xf]
    %v598 = vld [vmem:[%s2] sm:$0x1]
    %v600 = vperm.slane %v598, 0
    %v746 = vunpack.c.l.b16 %v454
    %v747 = vunpack.c.l.b16 %v455
    %v748 = vunpack.c.l.b16 %v456
    %v749 = vunpack.c.l.b16 %v457
    %v750 = vunpack.c.l.b16 %v458
    %v751 = vunpack.c.l.b16 %v459
    %v752 = vunpack.c.l.b16 %v460
    %v753 = vunpack.c.l.b16 %v461
    %v754 = vunpack.c.l.b16 %v462
    %v755 = vunpack.c.l.b16 %v463
    %v756 = vunpack.c.l.b16 %v464
    %v757 = vunpack.c.l.b16 %v465
    %v758 = vunpack.c.l.b16 %v466
    %v759 = vunpack.c.l.b16 %v467
    %v760 = vunpack.c.l.b16 %v468
    %v761 = vunpack.c.l.b16 %v469
    %v762 = vunpack.c.l.b16 %v470
    %v763 = vunpack.c.l.b16 %v471
    %v764 = vunpack.c.l.b16 %v472
    %v765 = vunpack.c.l.b16 %v473
    %v766 = vunpack.c.l.b16 %v474
    %v767 = vunpack.c.l.b16 %v475
    %v768 = vunpack.c.l.b16 %v476
    %v769 = vunpack.c.l.b16 %v477
    %v770 = vunpack.c.l.b16 %v478
    %v771 = vunpack.c.l.b16 %v479
    %v772 = vunpack.c.l.b16 %v480
    %v773 = vunpack.c.l.b16 %v481
    %v774 = vunpack.c.l.b16 %v482
    %v775 = vunpack.c.l.b16 %v483
    %v776 = vunpack.c.l.b16 %v484
    %v777 = vunpack.c.l.b16 %v485
    %v778 = vunpack.c.l.b16 %v486
    %v779 = vunpack.c.l.b16 %v487
    %v780 = vunpack.c.l.b16 %v488
    %v781 = vunpack.c.l.b16 %v489
    %v782 = vunpack.c.l.b16 %v490
    %v783 = vunpack.c.l.b16 %v491
    %v784 = vunpack.c.l.b16 %v492
    %v785 = vunpack.c.l.b16 %v493
    %v786 = vunpack.c.l.b16 %v494
    %v787 = vunpack.c.l.b16 %v495
    %v788 = vunpack.c.l.b16 %v496
    %v789 = vunpack.c.l.b16 %v497
    %v790 = vunpack.c.l.b16 %v498
    %v791 = vunpack.c.l.b16 %v499
    %v792 = vunpack.c.l.b16 %v500
    %v793 = vunpack.c.l.b16 %v501
    %v794 = vunpack.c.l.b16 %v502
    %v795 = vunpack.c.l.b16 %v503
    %v796 = vunpack.c.l.b16 %v504
    %v797 = vunpack.c.l.b16 %v505
    %v798 = vunpack.c.l.b16 %v506
    %v799 = vunpack.c.l.b16 %v507
    %v800 = vunpack.c.l.b16 %v508
    %v801 = vunpack.c.l.b16 %v509
    %v802 = vunpack.c.l.b16 %v510
    %v803 = vunpack.c.l.b16 %v511
    %v804 = vunpack.c.l.b16 %v512
    %v805 = vunpack.c.l.b16 %v513
    %v806 = vunpack.c.l.b16 %v514
    %v807 = vunpack.c.l.b16 %v515
    %v808 = vunpack.c.l.b16 %v516
    %v809 = vunpack.c.l.b16 %v517
    %v810 = vunpack.c.l.b16 %v518
    %v811 = vunpack.c.l.b16 %v519
    %v812 = vunpack.c.l.b16 %v520
    %v813 = vunpack.c.l.b16 %v521
    %v814 = vunpack.c.l.b16 %v522
    %v815 = vunpack.c.l.b16 %v523
    %v816 = vunpack.c.l.b16 %v524
    %v817 = vunpack.c.l.b16 %v525
    %v818 = vunpack.c.l.b16 %v526
    %v819 = vunpack.c.l.b16 %v527
    %v820 = vunpack.c.l.b16 %v528
    %v821 = vunpack.c.l.b16 %v529
    %v822 = vunpack.c.l.b16 %v530
    %v823 = vunpack.c.l.b16 %v531
    %v824 = vunpack.c.l.b16 %v532
    %v825 = vunpack.c.l.b16 %v533
    %v826 = vunpack.c.l.b16 %v534
    %v827 = vunpack.c.l.b16 %v535
    %v828 = vunpack.c.l.b16 %v536
    %v829 = vunpack.c.l.b16 %v537
    %v830 = vunpack.c.l.b16 %v538
    %v831 = vunpack.c.l.b16 %v539
    %v832 = vunpack.c.l.b16 %v540
    %v833 = vunpack.c.l.b16 %v541
    %v834 = vunpack.c.l.b16 %v542
    %v835 = vunpack.c.l.b16 %v543
    %v836 = vunpack.c.l.b16 %v544
    %v837 = vunpack.c.l.b16 %v545
    %v838 = vunpack.c.l.b16 %v546
    %v839 = vunpack.c.l.b16 %v547
    %v840 = vunpack.c.l.b16 %v548
    %v841 = vunpack.c.l.b16 %v549
    %v842 = vunpack.c.l.b16 %v550
    %v843 = vunpack.c.l.b16 %v551
    %v844 = vunpack.c.l.b16 %v552
    %v845 = vunpack.c.l.b16 %v553
    %v846 = vunpack.c.l.b16 %v554
    %v847 = vunpack.c.l.b16 %v555
    %v848 = vunpack.c.l.b16 %v556
    %v849 = vunpack.c.l.b16 %v557
    %v850 = vunpack.c.l.b16 %v558
    %v851 = vunpack.c.l.b16 %v559
    %v852 = vunpack.c.l.b16 %v560
    %v853 = vunpack.c.l.b16 %v561
    %v854 = vunpack.c.l.b16 %v562
    %v855 = vunpack.c.l.b16 %v563
    %v856 = vunpack.c.l.b16 %v564
    %v857 = vunpack.c.l.b16 %v565
    %v858 = vunpack.c.l.b16 %v566
    %v859 = vunpack.c.l.b16 %v567
    %v860 = vunpack.c.l.b16 %v568
    %v861 = vunpack.c.l.b16 %v569
    %v862 = vunpack.c.l.b16 %v570
    %v863 = vunpack.c.l.b16 %v571
    %v864 = vunpack.c.l.b16 %v572
    %v865 = vunpack.c.l.b16 %v573
    %v866 = vunpack.c.l.b16 %v574
    %v867 = vunpack.c.l.b16 %v575
    %v868 = vunpack.c.l.b16 %v576
    %v869 = vunpack.c.l.b16 %v577
    %v870 = vunpack.c.l.b16 %v578
    %v871 = vunpack.c.l.b16 %v579
    %v872 = vunpack.c.l.b16 %v580
    %v873 = vunpack.c.l.b16 %v581
    %v874 = vunpack.c.l.b16 %v582
    %v875 = vunpack.c.l.b16 %v583
    %v876 = vunpack.c.l.b16 %v584
    %v877 = vunpack.c.l.b16 %v585
    %v878 = vunpack.c.l.b16 %v586
    %v879 = vunpack.c.l.b16 %v587
    %v880 = vunpack.c.l.b16 %v588
    %v881 = vunpack.c.l.b16 %v589
    %v882 = vunpack.c.l.b16 %v590
    %v883 = vunpack.c.l.b16 %v591
    %v884 = vunpack.c.l.b16 %v592
    %v885 = vunpack.c.l.b16 %v593
    %v886 = vunpack.c.l.b16 %v594
    %v887 = vunpack.c.l.b16 %v595
    %v888 = vunpack.c.l.b16 %v596
    %v889 = vunpack.c.l.b16 %v597
    %v890 = vpack.c.b16 %v747, %v746
    %v891 = vpack.c.b16 %v749, %v748
    %v892 = vpack.c.b16 %v751, %v750
    %v893 = vpack.c.b16 %v753, %v752
    %v894 = vpack.c.b16 %v755, %v754
    %v895 = vpack.c.b16 %v757, %v756
    %v896 = vpack.c.b16 %v759, %v758
    %v897 = vpack.c.b16 %v761, %v760
    %v898 = vpack.c.b16 %v763, %v762
    %v899 = vpack.c.b16 %v765, %v764
    %v900 = vpack.c.b16 %v767, %v766
    %v901 = vpack.c.b16 %v769, %v768
    %v902 = vpack.c.b16 %v771, %v770
    %v903 = vpack.c.b16 %v773, %v772
    %v904 = vpack.c.b16 %v775, %v774
    %v905 = vpack.c.b16 %v777, %v776
    %v906 = vpack.c.b16 %v779, %v778
    %v907 = vpack.c.b16 %v781, %v780
    %v908 = vpack.c.b16 %v783, %v782
    %v909 = vpack.c.b16 %v785, %v784
    %v910 = vpack.c.b16 %v787, %v786
    %v911 = vpack.c.b16 %v789, %v788
    %v912 = vpack.c.b16 %v791, %v790
    %v913 = vpack.c.b16 %v793, %v792
    %v914 = vpack.c.b16 %v795, %v794
    %v915 = vpack.c.b16 %v797, %v796
    %v916 = vpack.c.b16 %v799, %v798
    %v917 = vpack.c.b16 %v801, %v800
    %v918 = vpack.c.b16 %v803, %v802
    %v919 = vpack.c.b16 %v805, %v804
    %v920 = vpack.c.b16 %v807, %v806
    %v921 = vpack.c.b16 %v809, %v808
    %v922 = vpack.c.b16 %v811, %v810
    %v923 = vpack.c.b16 %v813, %v812
    %v924 = vpack.c.b16 %v815, %v814
    %v925 = vpack.c.b16 %v817, %v816
    %v926 = vpack.c.b16 %v819, %v818
    %v927 = vpack.c.b16 %v821, %v820
    %v928 = vpack.c.b16 %v823, %v822
    %v929 = vpack.c.b16 %v825, %v824
    %v930 = vpack.c.b16 %v827, %v826
    %v931 = vpack.c.b16 %v829, %v828
    %v932 = vpack.c.b16 %v831, %v830
    %v933 = vpack.c.b16 %v833, %v832
    %v934 = vpack.c.b16 %v835, %v834
    %v935 = vpack.c.b16 %v837, %v836
    %v936 = vpack.c.b16 %v839, %v838
    %v937 = vpack.c.b16 %v841, %v840
    %v938 = vpack.c.b16 %v843, %v842
    %v939 = vpack.c.b16 %v845, %v844
    %v940 = vpack.c.b16 %v847, %v846
    %v941 = vpack.c.b16 %v849, %v848
    %v942 = vpack.c.b16 %v851, %v850
    %v943 = vpack.c.b16 %v853, %v852
    %v944 = vpack.c.b16 %v855, %v854
    %v945 = vpack.c.b16 %v857, %v856
    %v946 = vpack.c.b16 %v859, %v858
    %v947 = vpack.c.b16 %v861, %v860
    %v948 = vpack.c.b16 %v863, %v862
    %v949 = vpack.c.b16 %v865, %v864
    %v950 = vpack.c.b16 %v867, %v866
    %v951 = vpack.c.b16 %v869, %v868
    %v952 = vpack.c.b16 %v871, %v870
    %v953 = vpack.c.b16 %v873, %v872
    %v954 = vpack.c.b16 %v875, %v874
    %v955 = vpack.c.b16 %v877, %v876
    %v956 = vpack.c.b16 %v879, %v878
    %v957 = vpack.c.b16 %v881, %v880
    %v958 = vpack.c.b16 %v883, %v882
    %v959 = vpack.c.b16 %v885, %v884
    %v960 = vpack.c.b16 %v887, %v886
    %v961 = vpack.c.b16 %v889, %v888
    %1034 = vmatpush.bf16.msra.mxu0 %v897
    %1035 = vmatpush.bf16.msra.mxu0 %v896
    %1036 = vmatpush.bf16.msra.mxu0 %v895
    %1037 = vmatpush.bf16.msra.mxu0 %v894
    %1038 = vmatpush.bf16.msra.mxu0 %v893
    %1039 = vmatpush.bf16.msra.mxu0 %v892
    %1040 = vmatpush.bf16.msra.mxu0 %v891
    %1041 = vmatpush.bf16.msra.mxu0 %v890
    %1042 = vmatmul.bf16.gmra.mxu0 %v400
    %v1043 = vpop.f32.mrf.mxu0
    %v1044 = vadd.f32 %v600, %v1043
    %v1045 = vpop.f32.mrf.mxu0
    %v1046 = vadd.f32 %v600, %v1045
    %1047 = vmatmul.bf16.gmra.mxu0 %v406
    %v1048 = vpop.f32.mrf.mxu0
    %v1049 = vadd.f32 %v600, %v1048
    %v1050 = vpop.f32.mrf.mxu0
    %v1051 = vadd.f32 %v600, %v1050
    %1052 = vmatmul.bf16.gmra.mxu0 %v412
    %v1053 = vpop.f32.mrf.mxu0
    %v1054 = vadd.f32 %v600, %v1053
    %v1055 = vpop.f32.mrf.mxu0
    %v1056 = vadd.f32 %v600, %v1055
    %1057 = vmatmul.bf16.gmra.mxu0 %v418
    %v1058 = vpop.f32.mrf.mxu0
    %v1059 = vadd.f32 %v600, %v1058
    %v1060 = vpop.f32.mrf.mxu0
    %v1061 = vadd.f32 %v600, %v1060
    %1062 = vmatmul.bf16.gmra.mxu0 %v427
    %v1063 = vpop.f32.mrf.mxu0
    %v1064 = vadd.f32 %v600, %v1063
    %v1065 = vpop.f32.mrf.mxu0
    %v1066 = vadd.f32 %v600, %v1065
    %1067 = vmatmul.bf16.gmra.mxu0 %v433
    %v1068 = vpop.f32.mrf.mxu0
    %v1069 = vadd.f32 %v600, %v1068
    %v1070 = vpop.f32.mrf.mxu0
    %v1071 = vadd.f32 %v600, %v1070
    %1072 = vmatmul.bf16.gmra.mxu0 %v439
    %v1073 = vpop.f32.mrf.mxu0
    %v1074 = vadd.f32 %v600, %v1073
    %v1075 = vpop.f32.mrf.mxu0
    %v1076 = vadd.f32 %v600, %v1075
    %1077 = vmatmul.bf16.gmra.mxu0 %v445
    %v1078 = vpop.f32.mrf.mxu0
    %v1079 = vadd.f32 %v600, %v1078
    %v1080 = vpop.f32.mrf.mxu0
    %v1081 = vadd.f32 %v600, %v1080
    %1082 = vdwg.mxu0
    %1083 = vmatpush.bf16.msra.mxu0 %v905
    %1084 = vmatpush.bf16.msra.mxu0 %v904
    %1085 = vmatpush.bf16.msra.mxu0 %v903
    %1086 = vmatpush.bf16.msra.mxu0 %v902
    %1087 = vmatpush.bf16.msra.mxu0 %v901
    %1088 = vmatpush.bf16.msra.mxu0 %v900
    %1089 = vmatpush.bf16.msra.mxu0 %v899
    %1090 = vmatpush.bf16.msra.mxu0 %v898
    %1091 = vmatmul.bf16.gmra.mxu0 %v401
    %v1092 = vpop.f32.mrf.mxu0
    %v1093 = vadd.f32 %v1044, %v1092
    %v1094 = vpop.f32.mrf.mxu0
    %v1095 = vadd.f32 %v1046, %v1094
    %1096 = vmatmul.bf16.gmra.mxu0 %v407
    %v1097 = vpop.f32.mrf.mxu0
    %v1098 = vadd.f32 %v1049, %v1097
    %v1099 = vpop.f32.mrf.mxu0
    %v1100 = vadd.f32 %v1051, %v1099
    %1101 = vmatmul.bf16.gmra.mxu0 %v413
    %v1102 = vpop.f32.mrf.mxu0
    %v1103 = vadd.f32 %v1054, %v1102
    %v1104 = vpop.f32.mrf.mxu0
    %v1105 = vadd.f32 %v1056, %v1104
    %1106 = vmatmul.bf16.gmra.mxu0 %v419
    %v1107 = vpop.f32.mrf.mxu0
    %v1108 = vadd.f32 %v1059, %v1107
    %v1109 = vpop.f32.mrf.mxu0
    %v1110 = vadd.f32 %v1061, %v1109
    %1111 = vmatmul.bf16.gmra.mxu0 %v428
    %v1112 = vpop.f32.mrf.mxu0
    %v1113 = vadd.f32 %v1064, %v1112
    %v1114 = vpop.f32.mrf.mxu0
    %v1115 = vadd.f32 %v1066, %v1114
    %1116 = vmatmul.bf16.gmra.mxu0 %v434
    %v1117 = vpop.f32.mrf.mxu0
    %v1118 = vadd.f32 %v1069, %v1117
    %v1119 = vpop.f32.mrf.mxu0
    %v1120 = vadd.f32 %v1071, %v1119
    %1121 = vmatmul.bf16.gmra.mxu0 %v440
    %v1122 = vpop.f32.mrf.mxu0
    %v1123 = vadd.f32 %v1074, %v1122
    %v1124 = vpop.f32.mrf.mxu0
    %v1125 = vadd.f32 %v1076, %v1124
    %1126 = vmatmul.bf16.gmra.mxu0 %v446
    %v1127 = vpop.f32.mrf.mxu0
    %v1128 = vadd.f32 %v1079, %v1127
    %v1129 = vpop.f32.mrf.mxu0
    %v1130 = vadd.f32 %v1081, %v1129
    %1131 = vdwg.mxu0
    %1132 = vmatpush.bf16.msra.mxu0 %v913
    %1133 = vmatpush.bf16.msra.mxu0 %v912
    %1134 = vmatpush.bf16.msra.mxu0 %v911
    %1135 = vmatpush.bf16.msra.mxu0 %v910
    %1136 = vmatpush.bf16.msra.mxu0 %v909
    %1137 = vmatpush.bf16.msra.mxu0 %v908
    %1138 = vmatpush.bf16.msra.mxu0 %v907
    %1139 = vmatpush.bf16.msra.mxu0 %v906
    %1140 = vmatmul.bf16.gmra.mxu0 %v402
    %v1141 = vpop.f32.mrf.mxu0
    %v1142 = vadd.f32 %v1093, %v1141
    %v1143 = vpop.f32.mrf.mxu0
    %v1144 = vadd.f32 %v1095, %v1143
    %1145 = vmatmul.bf16.gmra.mxu0 %v408
    %v1146 = vpop.f32.mrf.mxu0
    %v1147 = vadd.f32 %v1098, %v1146
    %v1148 = vpop.f32.mrf.mxu0
    %v1149 = vadd.f32 %v1100, %v1148
    %1150 = vmatmul.bf16.gmra.mxu0 %v414
    %v1151 = vpop.f32.mrf.mxu0
    %v1152 = vadd.f32 %v1103, %v1151
    %v1153 = vpop.f32.mrf.mxu0
    %v1154 = vadd.f32 %v1105, %v1153
    %1155 = vmatmul.bf16.gmra.mxu0 %v420
    %v1156 = vpop.f32.mrf.mxu0
    %v1157 = vadd.f32 %v1108, %v1156
    %v1158 = vpop.f32.mrf.mxu0
    %v1159 = vadd.f32 %v1110, %v1158
    %1160 = vmatmul.bf16.gmra.mxu0 %v429
    %v1161 = vpop.f32.mrf.mxu0
    %v1162 = vadd.f32 %v1113, %v1161
    %v1163 = vpop.f32.mrf.mxu0
    %v1164 = vadd.f32 %v1115, %v1163
    %1165 = vmatmul.bf16.gmra.mxu0 %v435
    %v1166 = vpop.f32.mrf.mxu0
    %v1167 = vadd.f32 %v1118, %v1166
    %v1168 = vpop.f32.mrf.mxu0
    %v1169 = vadd.f32 %v1120, %v1168
    %1170 = vmatmul.bf16.gmra.mxu0 %v441
    %v1171 = vpop.f32.mrf.mxu0
    %v1172 = vadd.f32 %v1123, %v1171
    %v1173 = vpop.f32.mrf.mxu0
    %v1174 = vadd.f32 %v1125, %v1173
    %1175 = vmatmul.bf16.gmra.mxu0 %v447
    %v1176 = vpop.f32.mrf.mxu0
    %v1177 = vadd.f32 %v1128, %v1176
    %v1178 = vpop.f32.mrf.mxu0
    %v1179 = vadd.f32 %v1130, %v1178
    %1180 = vdwg.mxu0
    %1181 = vmatpush.bf16.msra.mxu0 %v921
    %1182 = vmatpush.bf16.msra.mxu0 %v920
    %1183 = vmatpush.bf16.msra.mxu0 %v919
    %1184 = vmatpush.bf16.msra.mxu0 %v918
    %1185 = vmatpush.bf16.msra.mxu0 %v917
    %1186 = vmatpush.bf16.msra.mxu0 %v916
    %1187 = vmatpush.bf16.msra.mxu0 %v915
    %1188 = vmatpush.bf16.msra.mxu0 %v914
    %1189 = vmatmul.bf16.gmra.mxu0 %v403
    %v1190 = vpop.f32.mrf.mxu0
    %v1191 = vadd.f32 %v1142, %v1190
    %v1192 = vpop.f32.mrf.mxu0
    %v1193 = vadd.f32 %v1144, %v1192
    %1194 = vmatmul.bf16.gmra.mxu0 %v409
    %v1195 = vpop.f32.mrf.mxu0
    %v1196 = vadd.f32 %v1147, %v1195
    %v1197 = vpop.f32.mrf.mxu0
    %v1198 = vadd.f32 %v1149, %v1197
    %1199 = vmatmul.bf16.gmra.mxu0 %v415
    %v1200 = vpop.f32.mrf.mxu0
    %v1201 = vadd.f32 %v1152, %v1200
    %v1202 = vpop.f32.mrf.mxu0
    %v1203 = vadd.f32 %v1154, %v1202
    %1204 = vmatmul.bf16.gmra.mxu0 %v421
    %v1205 = vpop.f32.mrf.mxu0
    %v1206 = vadd.f32 %v1157, %v1205
    %v1207 = vpop.f32.mrf.mxu0
    %v1208 = vadd.f32 %v1159, %v1207
    %1209 = vmatmul.bf16.gmra.mxu0 %v430
    %v1210 = vpop.f32.mrf.mxu0
    %v1211 = vadd.f32 %v1162, %v1210
    %v1212 = vpop.f32.mrf.mxu0
    %v1213 = vadd.f32 %v1164, %v1212
    %1214 = vmatmul.bf16.gmra.mxu0 %v436
    %v1215 = vpop.f32.mrf.mxu0
    %v1216 = vadd.f32 %v1167, %v1215
    %v1217 = vpop.f32.mrf.mxu0
    %v1218 = vadd.f32 %v1169, %v1217
    %1219 = vmatmul.bf16.gmra.mxu0 %v442
    %v1220 = vpop.f32.mrf.mxu0
    %v1221 = vadd.f32 %v1172, %v1220
    %v1222 = vpop.f32.mrf.mxu0
    %v1223 = vadd.f32 %v1174, %v1222
    %1224 = vmatmul.bf16.gmra.mxu0 %v448
    %v1225 = vpop.f32.mrf.mxu0
    %v1226 = vadd.f32 %v1177, %v1225
    %v1227 = vpop.f32.mrf.mxu0
    %v1228 = vadd.f32 %v1179, %v1227
    %1229 = vdwg.mxu0
    %1230 = vmatpush.bf16.msra.mxu0 %v929
    %1231 = vmatpush.bf16.msra.mxu0 %v928
    %1232 = vmatpush.bf16.msra.mxu0 %v927
    %1233 = vmatpush.bf16.msra.mxu0 %v926
    %1234 = vmatpush.bf16.msra.mxu0 %v925
    %1235 = vmatpush.bf16.msra.mxu0 %v924
    %1236 = vmatpush.bf16.msra.mxu0 %v923
    %1237 = vmatpush.bf16.msra.mxu0 %v922
    %1238 = vmatmul.bf16.gmra.mxu0 %v404
    %v1239 = vpop.f32.mrf.mxu0
    %v1240 = vadd.f32 %v1191, %v1239
    %v1241 = vpop.f32.mrf.mxu0
    %v1242 = vadd.f32 %v1193, %v1241
    %1243 = vmatmul.bf16.gmra.mxu0 %v410
    %v1244 = vpop.f32.mrf.mxu0
    %v1245 = vadd.f32 %v1196, %v1244
    %v1246 = vpop.f32.mrf.mxu0
    %v1247 = vadd.f32 %v1198, %v1246
    %1248 = vmatmul.bf16.gmra.mxu0 %v416
    %v1249 = vpop.f32.mrf.mxu0
    %v1250 = vadd.f32 %v1201, %v1249
    %v1251 = vpop.f32.mrf.mxu0
    %v1252 = vadd.f32 %v1203, %v1251
    %1253 = vmatmul.bf16.gmra.mxu0 %v422
    %v1254 = vpop.f32.mrf.mxu0
    %v1255 = vadd.f32 %v1206, %v1254
    %v1256 = vpop.f32.mrf.mxu0
    %v1257 = vadd.f32 %v1208, %v1256
    %1258 = vmatmul.bf16.gmra.mxu0 %v431
    %v1259 = vpop.f32.mrf.mxu0
    %v1260 = vadd.f32 %v1211, %v1259
    %v1261 = vpop.f32.mrf.mxu0
    %v1262 = vadd.f32 %v1213, %v1261
    %1263 = vmatmul.bf16.gmra.mxu0 %v437
    %v1264 = vpop.f32.mrf.mxu0
    %v1265 = vadd.f32 %v1216, %v1264
    %v1266 = vpop.f32.mrf.mxu0
    %v1267 = vadd.f32 %v1218, %v1266
    %1268 = vmatmul.bf16.gmra.mxu0 %v443
    %v1269 = vpop.f32.mrf.mxu0
    %v1270 = vadd.f32 %v1221, %v1269
    %v1271 = vpop.f32.mrf.mxu0
    %v1272 = vadd.f32 %v1223, %v1271
    %1273 = vmatmul.bf16.gmra.mxu0 %v449
    %v1274 = vpop.f32.mrf.mxu0
    %v1275 = vadd.f32 %v1226, %v1274
    %v1276 = vpop.f32.mrf.mxu0
    %v1277 = vadd.f32 %v1228, %v1276
    %1278 = vdwg.mxu0
    %1279 = vmatpush.bf16.msra.mxu0 %v937
    %1280 = vmatpush.bf16.msra.mxu0 %v936
    %1281 = vmatpush.bf16.msra.mxu0 %v935
    %1282 = vmatpush.bf16.msra.mxu0 %v934
    %1283 = vmatpush.bf16.msra.mxu0 %v933
    %1284 = vmatpush.bf16.msra.mxu0 %v932
    %1285 = vmatpush.bf16.msra.mxu0 %v931
    %1286 = vmatpush.bf16.msra.mxu0 %v930
    %1287 = vmatmul.bf16.gmra.mxu0 %v405
    %v1288 = vpop.f32.mrf.mxu0
    %v1289 = vadd.f32 %v1240, %v1288
    %v1290 = vpop.f32.mrf.mxu0
    %v1291 = vadd.f32 %v1242, %v1290
    %1292 = vmatmul.bf16.gmra.mxu0 %v411
    %v1293 = vpop.f32.mrf.mxu0
    %v1294 = vadd.f32 %v1245, %v1293
    %v1295 = vpop.f32.mrf.mxu0
    %v1296 = vadd.f32 %v1247, %v1295
    %1297 = vmatmul.bf16.gmra.mxu0 %v417
    %v1298 = vpop.f32.mrf.mxu0
    %v1299 = vadd.f32 %v1250, %v1298
    %v1300 = vpop.f32.mrf.mxu0
    %v1301 = vadd.f32 %v1252, %v1300
    %1302 = vmatmul.bf16.gmra.mxu0 %v423
    %v1303 = vpop.f32.mrf.mxu0
    %v1304 = vadd.f32 %v1255, %v1303
    %v1305 = vpop.f32.mrf.mxu0
    %v1306 = vadd.f32 %v1257, %v1305
    %1307 = vmatmul.bf16.gmra.mxu0 %v432
    %v1308 = vpop.f32.mrf.mxu0
    %v1309 = vadd.f32 %v1260, %v1308
    %v1310 = vpop.f32.mrf.mxu0
    %v1311 = vadd.f32 %v1262, %v1310
    %1312 = vmatmul.bf16.gmra.mxu0 %v438
    %v1313 = vpop.f32.mrf.mxu0
    %v1314 = vadd.f32 %v1265, %v1313
    %v1315 = vpop.f32.mrf.mxu0
    %v1316 = vadd.f32 %v1267, %v1315
    %1317 = vmatmul.bf16.gmra.mxu0 %v444
    %v1318 = vpop.f32.mrf.mxu0
    %v1319 = vadd.f32 %v1270, %v1318
    %v1320 = vpop.f32.mrf.mxu0
    %v1321 = vadd.f32 %v1272, %v1320
    %1322 = vmatmul.bf16.gmra.mxu0 %v450
    %v1323 = vpop.f32.mrf.mxu0
    %v1324 = vadd.f32 %v1275, %v1323
    %v1325 = vpop.f32.mrf.mxu0
    %v1326 = vadd.f32 %v1277, %v1325
    %1327 = vdwg.mxu0
    %1328 = vmatpush.bf16.msra.mxu0 %v945
    %1329 = vmatpush.bf16.msra.mxu0 %v944
    %1330 = vmatpush.bf16.msra.mxu0 %v943
    %1331 = vmatpush.bf16.msra.mxu0 %v942
    %1332 = vmatpush.bf16.msra.mxu0 %v941
    %1333 = vmatpush.bf16.msra.mxu0 %v940
    %1334 = vmatpush.bf16.msra.mxu0 %v939
    %1335 = vmatpush.bf16.msra.mxu0 %v938
    %1336 = vmatmul.bf16.gmra.mxu0 %v406
    %v1337 = vpop.f32.mrf.mxu0
    %v1338 = vadd.f32 %v1289, %v1337
    %v1339 = vpop.f32.mrf.mxu0
    %v1340 = vadd.f32 %v1291, %v1339
    %1341 = vmatmul.bf16.gmra.mxu0 %v412
    %v1342 = vpop.f32.mrf.mxu0
    %v1343 = vadd.f32 %v1294, %v1342
    %v1344 = vpop.f32.mrf.mxu0
    %v1345 = vadd.f32 %v1296, %v1344
    %1346 = vmatmul.bf16.gmra.mxu0 %v418
    %v1347 = vpop.f32.mrf.mxu0
    %v1348 = vadd.f32 %v1299, %v1347
    %v1349 = vpop.f32.mrf.mxu0
    %v1350 = vadd.f32 %v1301, %v1349
    %1351 = vmatmul.bf16.gmra.mxu0 %v424
    %v1352 = vpop.f32.mrf.mxu0
    %v1353 = vadd.f32 %v1304, %v1352
    %v1354 = vpop.f32.mrf.mxu0
    %v1355 = vadd.f32 %v1306, %v1354
    %1356 = vmatmul.bf16.gmra.mxu0 %v433
    %v1357 = vpop.f32.mrf.mxu0
    %v1358 = vadd.f32 %v1309, %v1357
    %v1359 = vpop.f32.mrf.mxu0
    %v1360 = vadd.f32 %v1311, %v1359
    %1361 = vmatmul.bf16.gmra.mxu0 %v439
    %v1362 = vpop.f32.mrf.mxu0
    %v1363 = vadd.f32 %v1314, %v1362
    %v1364 = vpop.f32.mrf.mxu0
    %v1365 = vadd.f32 %v1316, %v1364
    %1366 = vmatmul.bf16.gmra.mxu0 %v445
    %v1367 = vpop.f32.mrf.mxu0
    %v1368 = vadd.f32 %v1319, %v1367
    %v1369 = vpop.f32.mrf.mxu0
    %v1370 = vadd.f32 %v1321, %v1369
    %1371 = vmatmul.bf16.gmra.mxu0 %v451
    %v1372 = vpop.f32.mrf.mxu0
    %v1373 = vadd.f32 %v1324, %v1372
    %v1374 = vpop.f32.mrf.mxu0
    %v1375 = vadd.f32 %v1326, %v1374
    %1376 = vdwg.mxu0
    %1377 = vmatpush.bf16.msra.mxu0 %v953
    %1378 = vmatpush.bf16.msra.mxu0 %v952
    %1379 = vmatpush.bf16.msra.mxu0 %v951
    %1380 = vmatpush.bf16.msra.mxu0 %v950
    %1381 = vmatpush.bf16.msra.mxu0 %v949
    %1382 = vmatpush.bf16.msra.mxu0 %v948
    %1383 = vmatpush.bf16.msra.mxu0 %v947
    %1384 = vmatpush.bf16.msra.mxu0 %v946
    %1385 = vmatmul.bf16.gmra.mxu0 %v407
    %v1386 = vpop.f32.mrf.mxu0
    %v1387 = vadd.f32 %v1338, %v1386
    %v1388 = vpop.f32.mrf.mxu0
    %v1389 = vadd.f32 %v1340, %v1388
    %1390 = vmatmul.bf16.gmra.mxu0 %v413
    %v1391 = vpop.f32.mrf.mxu0
    %v1392 = vadd.f32 %v1343, %v1391
    %v1393 = vpop.f32.mrf.mxu0
    %v1394 = vadd.f32 %v1345, %v1393
    %1395 = vmatmul.bf16.gmra.mxu0 %v419
    %v1396 = vpop.f32.mrf.mxu0
    %v1397 = vadd.f32 %v1348, %v1396
    %v1398 = vpop.f32.mrf.mxu0
    %v1399 = vadd.f32 %v1350, %v1398
    %1400 = vmatmul.bf16.gmra.mxu0 %v425
    %v1401 = vpop.f32.mrf.mxu0
    %v1402 = vadd.f32 %v1353, %v1401
    %v1403 = vpop.f32.mrf.mxu0
    %v1404 = vadd.f32 %v1355, %v1403
    %1405 = vmatmul.bf16.gmra.mxu0 %v434
    %v1406 = vpop.f32.mrf.mxu0
    %v1407 = vadd.f32 %v1358, %v1406
    %v1408 = vpop.f32.mrf.mxu0
    %v1409 = vadd.f32 %v1360, %v1408
    %1410 = vmatmul.bf16.gmra.mxu0 %v440
    %v1411 = vpop.f32.mrf.mxu0
    %v1412 = vadd.f32 %v1363, %v1411
    %v1413 = vpop.f32.mrf.mxu0
    %v1414 = vadd.f32 %v1365, %v1413
    %1415 = vmatmul.bf16.gmra.mxu0 %v446
    %v1416 = vpop.f32.mrf.mxu0
    %v1417 = vadd.f32 %v1368, %v1416
    %v1418 = vpop.f32.mrf.mxu0
    %v1419 = vadd.f32 %v1370, %v1418
    %1420 = vmatmul.bf16.gmra.mxu0 %v452
    %v1421 = vpop.f32.mrf.mxu0
    %v1422 = vadd.f32 %v1373, %v1421
    %v1423 = vpop.f32.mrf.mxu0
    %v1424 = vadd.f32 %v1375, %v1423
    %1425 = vdwg.mxu0
    %1426 = vmatpush.bf16.msra.mxu0 %v961
    %1427 = vmatpush.bf16.msra.mxu0 %v960
    %1428 = vmatpush.bf16.msra.mxu0 %v959
    %1429 = vmatpush.bf16.msra.mxu0 %v958
    %1430 = vmatpush.bf16.msra.mxu0 %v957
    %1431 = vmatpush.bf16.msra.mxu0 %v956
    %1432 = vmatpush.bf16.msra.mxu0 %v955
    %1433 = vmatpush.bf16.msra.mxu0 %v954
    %1434 = vmatmul.bf16.gmra.mxu0 %v408
    %v1435 = vpop.f32.mrf.mxu0
    %v1436 = vadd.f32 %v1387, %v1435
    %v1437 = vpop.f32.mrf.mxu0
    %v1438 = vadd.f32 %v1389, %v1437
    %1439 = vmatmul.bf16.gmra.mxu0 %v414
    %v1440 = vpop.f32.mrf.mxu0
    %v1441 = vadd.f32 %v1392, %v1440
    %v1442 = vpop.f32.mrf.mxu0
    %v1443 = vadd.f32 %v1394, %v1442
    %1444 = vmatmul.bf16.gmra.mxu0 %v420
    %v1445 = vpop.f32.mrf.mxu0
    %v1446 = vadd.f32 %v1397, %v1445
    %v1447 = vpop.f32.mrf.mxu0
    %v1448 = vadd.f32 %v1399, %v1447
    %1449 = vmatmul.bf16.gmra.mxu0 %v426
    %v1450 = vpop.f32.mrf.mxu0
    %v1451 = vadd.f32 %v1402, %v1450
    %v1452 = vpop.f32.mrf.mxu0
    %v1453 = vadd.f32 %v1404, %v1452
    %1454 = vmatmul.bf16.gmra.mxu0 %v435
    %v1455 = vpop.f32.mrf.mxu0
    %v1456 = vadd.f32 %v1407, %v1455
    %v1457 = vpop.f32.mrf.mxu0
    %v1458 = vadd.f32 %v1409, %v1457
    %1459 = vmatmul.bf16.gmra.mxu0 %v441
    %v1460 = vpop.f32.mrf.mxu0
    %v1461 = vadd.f32 %v1412, %v1460
    %v1462 = vpop.f32.mrf.mxu0
    %v1463 = vadd.f32 %v1414, %v1462
    %1464 = vmatmul.bf16.gmra.mxu0 %v447
    %v1465 = vpop.f32.mrf.mxu0
    %v1466 = vadd.f32 %v1417, %v1465
    %v1467 = vpop.f32.mrf.mxu0
    %v1468 = vadd.f32 %v1419, %v1467
    %1469 = vmatmul.bf16.gmra.mxu0 %v453
    %v1470 = vpop.f32.mrf.mxu0
    %v1471 = vadd.f32 %v1422, %v1470
    %v1472 = vpop.f32.mrf.mxu0
    %v1473 = vadd.f32 %v1424, %v1472
    %1474 = vdwg.mxu0
    %v1475 = vmax.f32 %v1436, 0.0
    %v1476 = vmax.f32 %v1438, 0.0
    %v1477 = vmax.f32 %v1441, 0.0
    %v1478 = vmax.f32 %v1443, 0.0
    %v1479 = vmax.f32 %v1446, 0.0
    %v1480 = vmax.f32 %v1448, 0.0
    %v1481 = vmax.f32 %v1451, 0.0
    %v1482 = vmax.f32 %v1453, 0.0
    %v1483 = vmax.f32 %v1456, 0.0
    %v1484 = vmax.f32 %v1458, 0.0
    %v1485 = vmax.f32 %v1461, 0.0
    %v1486 = vmax.f32 %v1463, 0.0
    %v1487 = vmax.f32 %v1466, 0.0
    %v1488 = vmax.f32 %v1468, 0.0
    %v1489 = vmax.f32 %v1471, 0.0
    %v1490 = vmax.f32 %v1473, 0.0
    %v1491 = vpack.c.bf16 %v1476, %v1475
    %v1492 = vpack.c.bf16 %v1478, %v1477
    %v1493 = vpack.c.bf16 %v1480, %v1479
    %v1494 = vpack.c.bf16 %v1482, %v1481
    %v1495 = vpack.c.bf16 %v1484, %v1483
    %v1496 = vpack.c.bf16 %v1486, %v1485
    %v1497 = vpack.c.bf16 %v1488, %v1487
    %v1498 = vpack.c.bf16 %v1490, %v1489
    %v1499 = vld [vmem:[%s3] sm:$0xf]
    %v1500 = vld [vmem:[%s3 + $0x4] sm:$0xf]
    %v1501 = vld [vmem:[%s3 + $0x8] sm:$0xf]
    %v1502 = vld [vmem:[%s3 + $0xc] sm:$0xf]
    %v1507 = vunpack.c.l.b16 %v1499
    %v1508 = vunpack.c.l.b16 %v1500
    %v1509 = vunpack.c.l.b16 %v1501
    %v1510 = vunpack.c.l.b16 %v1502
    %v1511 = vpack.c.b16 %v1508, %v1507
    %v1512 = vpack.c.b16 %v1510, %v1509
    %vm1515 = vcmask 261120
    %v1517 = vsel %vm1515, %v1491, 0
    %v1520 = vsel %vm1515, %v1492, 0
    %v1523 = vsel %vm1515, %v1493, 0
    %v1526 = vsel %vm1515, %v1494, 0
    %v1529 = vsel %vm1515, %v1495, 0
    %v1532 = vsel %vm1515, %v1496, 0
    %v1535 = vsel %vm1515, %v1497, 0
    %v1538 = vsel %vm1515, %v1498, 0
    %1540 = vmatpush.bf16.msra.mxu0 0
    %1541 = vmatpush.bf16.msra.mxu0 0
    %1542 = vmatpush.bf16.msra.mxu0 0
    %1543 = vmatpush.bf16.msra.mxu0 0
    %1544 = vmatpush.bf16.msra.mxu0 0
    %1545 = vmatpush.bf16.msra.mxu0 0
    %1546 = vmatpush.bf16.msra.mxu0 %v1512
    %1547 = vmatpush.bf16.msra.mxu0 %v1511
    %1548 = vmatmul.bf16.gmra.mxu0 %v1517
    %v1549 = vpop.f32.mrf.mxu0
    %v1550 = vadd.f32 0.0, %v1549
    %v1551 = vpop.f32.mrf.mxu0
    %v1552 = vadd.f32 0.0, %v1551
    %1553 = vmatmul.bf16.gmra.mxu0 %v1520
    %v1554 = vpop.f32.mrf.mxu0
    %v1555 = vadd.f32 0.0, %v1554
    %v1556 = vpop.f32.mrf.mxu0
    %v1557 = vadd.f32 0.0, %v1556
    %1558 = vmatmul.bf16.gmra.mxu0 %v1523
    %v1559 = vpop.f32.mrf.mxu0
    %v1560 = vadd.f32 0.0, %v1559
    %v1561 = vpop.f32.mrf.mxu0
    %v1562 = vadd.f32 0.0, %v1561
    %1563 = vmatmul.bf16.gmra.mxu0 %v1526
    %v1564 = vpop.f32.mrf.mxu0
    %v1565 = vadd.f32 0.0, %v1564
    %v1566 = vpop.f32.mrf.mxu0
    %v1567 = vadd.f32 0.0, %v1566
    %1568 = vmatmul.bf16.gmra.mxu0 %v1529
    %v1569 = vpop.f32.mrf.mxu0
    %v1570 = vadd.f32 0.0, %v1569
    %v1571 = vpop.f32.mrf.mxu0
    %v1572 = vadd.f32 0.0, %v1571
    %1573 = vmatmul.bf16.gmra.mxu0 %v1532
    %v1574 = vpop.f32.mrf.mxu0
    %v1575 = vadd.f32 0.0, %v1574
    %v1576 = vpop.f32.mrf.mxu0
    %v1577 = vadd.f32 0.0, %v1576
    %1578 = vmatmul.bf16.gmra.mxu0 %v1535
    %v1579 = vpop.f32.mrf.mxu0
    %v1580 = vadd.f32 0.0, %v1579
    %v1581 = vpop.f32.mrf.mxu0
    %v1582 = vadd.f32 0.0, %v1581
    %1583 = vmatmul.bf16.gmra.mxu0 %v1538
    %v1584 = vpop.f32.mrf.mxu0
    %v1585 = vadd.f32 0.0, %v1584
    %v1586 = vpop.f32.mrf.mxu0
    %v1587 = vadd.f32 0.0, %v1586
    %1588 = vdwg.mxu0
    %v1589 = vadd.f32 %v97, %v1550
    %v1590 = vadd.f32 %v100, %v1552
    %v1591 = vadd.f32 %v103, %v1555
    %v1592 = vadd.f32 %v106, %v1557
    %v1593 = vadd.f32 %v109, %v1560
    %v1594 = vadd.f32 %v112, %v1562
    %v1595 = vadd.f32 %v115, %v1565
    %v1596 = vadd.f32 %v118, %v1567
    %v1597 = vadd.f32 %v121, %v1570
    %v1598 = vadd.f32 %v124, %v1572
    %v1599 = vadd.f32 %v127, %v1575
    %v1600 = vadd.f32 %v130, %v1577
    %v1601 = vadd.f32 %v133, %v1580
    %v1602 = vadd.f32 %v136, %v1582
    %v1603 = vadd.f32 %v139, %v1585
    %v1604 = vadd.f32 %v142, %v1587
    %v1605 = vld [vmem:[%s4] sm:$0x1]
    %v1607 = vperm.slane %v1605, 0
    %v1609 = vadd.f32 %v1589, %v1607
    %v1610 = vadd.f32 %v1590, %v1607
    %v1611 = vadd.f32 %v1591, %v1607
    %v1612 = vadd.f32 %v1592, %v1607
    %v1613 = vadd.f32 %v1593, %v1607
    %v1614 = vadd.f32 %v1594, %v1607
    %v1615 = vadd.f32 %v1595, %v1607
    %v1616 = vadd.f32 %v1596, %v1607
    %v1617 = vadd.f32 %v1597, %v1607
    %v1618 = vadd.f32 %v1598, %v1607
    %v1619 = vadd.f32 %v1599, %v1607
    %v1620 = vadd.f32 %v1600, %v1607
    %v1621 = vadd.f32 %v1601, %v1607
    %v1622 = vadd.f32 %v1602, %v1607
    %v1623 = vadd.f32 %v1603, %v1607
    %v1624 = vadd.f32 %v1604, %v1607
    %1625 = vst [vmem:[#allocation2] sm:$0xff] %v1609
    %1626 = vst [vmem:[#allocation2 + $0x8] sm:$0xff] %v1610
    %1627 = vst [vmem:[#allocation2 + $0x10] sm:$0xff] %v1611
    %1628 = vst [vmem:[#allocation2 + $0x18] sm:$0xff] %v1612
    %1629 = vst [vmem:[#allocation2 + $0x20] sm:$0xff] %v1613
    %1630 = vst [vmem:[#allocation2 + $0x28] sm:$0xff] %v1614
    %1631 = vst [vmem:[#allocation2 + $0x30] sm:$0xff] %v1615
    %1632 = vst [vmem:[#allocation2 + $0x38] sm:$0xff] %v1616
    %1633 = vst [vmem:[#allocation2 + $0x40] sm:$0xff] %v1617
    %1634 = vst [vmem:[#allocation2 + $0x48] sm:$0xff] %v1618
    %1635 = vst [vmem:[#allocation2 + $0x50] sm:$0xff] %v1619
    %1636 = vst [vmem:[#allocation2 + $0x58] sm:$0xff] %v1620
    %1637 = vst [vmem:[#allocation2 + $0x60] sm:$0xff] %v1621
    %1638 = vst [vmem:[#allocation2 + $0x68] sm:$0xff] %v1622
    %1639 = vst [vmem:[#allocation2 + $0x70] sm:$0xff] %v1623
    %1640 = vst [vmem:[#allocation2 + $0x78] sm:$0xff] %v1624
    // Predicated region
    $region22: #{resblock_forward.1} parent=1 // pred_check
      _
    $region23: #{resblock_forward.1} parent=1 // pred_check_branch
      %1642 = sbr.rel (0) target = $region25
    $region24: #{resblock_forward.1} parent=1 // pred_region
      %1644 = vsyncadd [#allocation3], 0
      %s1645 = sshll.u32 [#allocation2], 4
      %s1646 = int_to_ptr.vmem [resolvable:$true] %s1645
      %s1647 = sshll.u32 %s5, 4
      %s1648 = int_to_ptr.hbm [resolvable:$true] %s1647
      %1653 = dma.vmem_to_hbm [thread:$0]  %s1646, 2048, %s1648, [#allocation3], 128, 128, 8
    $region25: #{resblock_forward.1} parent=1 // pred_fallthru
      _
    // Predicated region
    $region26: #{resblock_forward.1} parent=1 // pred_check
      _
    $region27: #{resblock_forward.1} parent=1 // pred_check_branch
      %1655 = sbr.rel (0) target = $region29
    $region28: #{resblock_forward.1} parent=1 // pred_region
      %1657 = dma.done [#allocation3], 2048
    $region29: #{resblock_forward.1} parent=1 // pred_fallthru
      _
    %1658 = vsyncpa [#allocation3], 1

</llo_original>
